<compile_context>
chip_gen: v5e
topology: v5e:2x2
jax: 0.10.0
libtpu: 0.0.40
codegen_flags: <defaults>
</compile_context>

<pallas_src>
import functools
import math

import jax
import jax.numpy as jnp
from jax.experimental import pallas as pl
from jax.experimental.pallas import tpu as pltpu


def _round_up(n, m):
    return ((n + m - 1) // m) * m


def _vmem_cap_bytes():
    """Generation-aware cap for vmem_limit_bytes."""
    try:
        kind = jax.devices()[0].device_kind.lower()
    except Exception:
        kind = ""
    if "v7" in kind:
        return 56 * 1024 * 1024          # 64 MiB physical on v7x
    if any(v in kind for v in ("v4", "v5", "v6")):
        return 100 * 1024 * 1024         # 128 MiB physical
    return 56 * 1024 * 1024              # unknown generation: conservative


def _make_kernel(gp, hd, khp):
    """Kernel for one grid step == one LSTM layer.

    gp  : per-gate column stride in the packed weight (gp == hd when gates are
          packed contiguously, round_up(hd,128) when per-gate padded).
    hd  : h_dim.
    khp : sublane-aligned row offset of the recurrent weight half.
    """

    def kernel(x_ref, wx0_ref, wh_ref, b_ref, hprev_ref, cprev_ref,
               h_out_ref, c_out_ref, hin_ref, z_ref):
        l = pl.program_id(0)

        @pl.when(l == 0)
        def _init_carry():
            # Layer 0 has no previous-layer h; its input comes from x via wx0.
            hin_ref[...] = jnp.zeros_like(hin_ref)

        # Recurrent prev_h[l], rounded to bf16 exactly like the matmul LHS.
        h_rec = hprev_ref[0].astype(jnp.bfloat16)

        # z = W_in @ input_h + W_hh @ prev_h ; bf16 operands, f32 MXU acc.
        z_ref[...] = (
            jnp.dot(hin_ref[...], wh_ref[0, :hd, :],
                    preferred_element_type=jnp.float32)
            + jnp.dot(h_rec, wh_ref[0, khp:khp + hd, :],
                      preferred_element_type=jnp.float32))

        @pl.when(l == 0)
        def _layer0_x_proj():
            # Layer 0 only: add the x projection (wx0 is DMA'd once).
            z_ref[...] += jnp.dot(x_ref[...], wx0_ref[...],
                                  preferred_element_type=jnp.float32)

        z = z_ref[...] + b_ref[0]

        # One EUP slab covering the i/f/o sigmoids; tanh for the g gate.
        sig = jax.nn.sigmoid(z[:, :2 * gp + hd])
        i_s = sig[:, 0 * gp:0 * gp + hd]
        f_s = sig[:, 1 * gp:1 * gp + hd]
        o_s = sig[:, 2 * gp:2 * gp + hd]
        g_t = jnp.tanh(z[:, 3 * gp:3 * gp + hd])

        c_new = f_s * cprev_ref[0] + i_s * g_t
        h_new = o_s * jnp.tanh(c_new)

        h_out_ref[0] = h_new.astype(h_out_ref.dtype)
        c_out_ref[0] = c_new.astype(c_out_ref.dtype)

        # Carry h to the next layer's input half (bf16).
        @pl.when(l + 1 < pl.num_programs(0))
        def _carry():
            hin_ref[...] = h_new.astype(hin_ref.dtype)

    return kernel


def _fused_forward(x_pad, h_stack, c_stack, wx0, w_h, b_packed, *, gp):
    """x_pad: (BP, KPX) bf16; h/c stacks: (L, BP, HD) f32;
    wx0: (KPX, NC) bf16; w_h: (L, 2*KHP, NC) bf16; b_packed: (L, 1, NC) f32."""
    num_layers, two_khp, nc = w_h.shape
    khp = two_khp // 2
    bp, kpx = x_pad.shape
    hd = h_stack.shape[-1]

    grid_spec = pltpu.PrefetchScalarGridSpec(
        num_scalar_prefetch=0,
        grid=(num_layers,),
        in_specs=[
            # TODO(synk): mark the constant-index x/wx0 specs single-buffered
            # (pipeline_mode=pl.Buffered(1)) once VMEM gets tight.
            pl.BlockSpec((bp, kpx), lambda l: (0, 0)),            # x (once)
            pl.BlockSpec((kpx, nc), lambda l: (0, 0)),            # wx0 (once)
            pl.BlockSpec((1, 2 * khp, nc), lambda l: (l, 0, 0)),  # W[l]
            pl.BlockSpec((1, 1, nc), lambda l: (l, 0, 0)),        # b[l]
            pl.BlockSpec((1, bp, hd), lambda l: (l, 0, 0)),       # prev_h[l]
            pl.BlockSpec((1, bp, hd), lambda l: (l, 0, 0)),       # prev_c[l]
        ],
        out_specs=(
            pl.BlockSpec((1, bp, hd), lambda l: (l, 0, 0)),       # h[l]
            pl.BlockSpec((1, bp, hd), lambda l: (l, 0, 0)),       # c[l]
        ),
        scratch_shapes=[
            pltpu.VMEM((bp, hd), jnp.bfloat16),  # inter-layer h carry
            pltpu.VMEM((bp, nc), jnp.float32),   # pre-activation accumulator
        ],
    )

    # VMEM budget from the actual block sizes (2x slack), clamped per chip.
    block_bytes = (
        2 * (2 * khp) * nc * 2            # weight tile, double-buffered, bf16
        + kpx * nc * 2                    # wx0 (fetched once)
        + bp * kpx * 2                    # x
        + 2 * nc * 4                      # bias, double-buffered
        + 4 * 2 * bp * max(hd, 128) * 4   # h/c in + out tiles (lane-padded)
        + bp * hd * 2 + bp * nc * 4       # scratches
    )
    vmem_limit = int(min(_vmem_cap_bytes(),
                         max(2 * block_bytes, 32 * 1024 * 1024)))

    return pl.pallas_call(
        _make_kernel(gp, hd, khp),
        out_shape=(
            jax.ShapeDtypeStruct((num_layers, bp, hd), jnp.float32),
            jax.ShapeDtypeStruct((num_layers, bp, hd), jnp.float32),
        ),
        grid_spec=grid_spec,
        compiler_params=pltpu.CompilerParams(
            dimension_semantics=("arbitrary",),   # layer carry is sequential
            vmem_limit_bytes=vmem_limit,
        ),
    )(x_pad, wx0, w_h, b_packed, h_stack, c_stack)


class SeqLSTMPallas:
    """JAX/Pallas port of the PyTorch SeqLSTM module (forward only)."""

    def __init__(self, i_dim=200, h_dim=32, num_layers=1, dropout=0.0, key=None):
        assert h_dim >= 1 and num_layers >= 1
        self.i_dim = i_dim
        self.h_dim = h_dim
        self.num_layers = num_layers
        self.dropout = dropout
        # TODO(synk): training-mode inter-layer dropout is not applied; this
        # matches PyTorch eval() / dropout=0 behavior.

        if key is None:
            key = jax.random.PRNGKey(0)

        # Column layout: per-gate 128 padding only when h_dim >= 128 (aligned
        # gate slices); otherwise contiguous gates, whole axis padded to 128.
        gp = _round_up(h_dim, 128) if h_dim >= 128 else h_dim
        nc = _round_up(4 * gp, 128)
        kpx = _round_up(i_dim, 8)      # layer-0 x contraction rows
        khp = _round_up(h_dim, 8)      # offset of the recurrent weight half
        self.GP, self.NC, self.KPX, self.KHP = gp, nc, kpx, khp

        self.params = []  # f32 (wx, wh, bias) per layer, for the reference
        wx0 = jnp.zeros((kpx, nc), jnp.float32)
        w_h = jnp.zeros((num_layers, 2 * khp, nc), jnp.float32)
        b_p = jnp.zeros((num_layers, 1, nc), jnp.float32)

        for l in range(num_layers):
            in_dim = (h_dim + i_dim) if l == 0 else (2 * h_dim)
            x_in = i_dim if l == 0 else h_dim
            key, kw, kb = jax.random.split(key, 3)
            bound = 1.0 / math.sqrt(in_dim)
            w = jax.random.uniform(kw, (in_dim, 4 * h_dim), jnp.float32,
                                   minval=-bound, maxval=bound)
            bias = jax.random.uniform(kb, (1, 4 * h_dim), jnp.float32,
                                      minval=-bound, maxval=bound)
            wx, wh = w[:x_in, :], w[x_in:, :]
            self.params.append((wx, wh, bias))

            for g in range(4):
                src = slice(g * h_dim, (g + 1) * h_dim)
                dst = slice(g * gp, g * gp + h_dim)
                if l == 0:
                    wx0 = wx0.at[:i_dim, dst].set(wx[:, src])
                else:
                    w_h = w_h.at[l, :h_dim, dst].set(wx[:, src])
                w_h = w_h.at[l, khp:khp + h_dim, dst].set(wh[:, src])
                b_p = b_p.at[l, 0, dst].set(bias[0, src])

        self.wx0 = wx0.astype(jnp.bfloat16)     # weight-BW-bound: store bf16
        self.w_h = w_h.astype(jnp.bfloat16)
        self.b_packed = b_p                     # bias stays f32
        self._forward = jax.jit(functools.partial(_fused_forward, gp=gp))

    def __call__(self, x, prev_h=None):
        batch = x.shape[0]
        hd, num_layers = self.h_dim, self.num_layers
        bp = 8 if batch <= 8 else _round_up(batch, 16)   # packed bf16 sublanes

        if prev_h is None:
            zeros = jnp.zeros((batch, hd), jnp.float32)
            prev_h = [(zeros, zeros) for _ in range(num_layers)]

        x_pad = (jnp.zeros((bp, self.KPX), jnp.float32)
                 .at[:batch, :self.i_dim].set(x)
                 .astype(jnp.bfloat16))
        h_stack = jnp.zeros((num_layers, bp, hd), jnp.float32)
        c_stack = jnp.zeros((num_layers, bp, hd), jnp.float32)
        for l in range(num_layers):
            h_stack = h_stack.at[l, :batch, :].set(prev_h[l][0])
            c_stack = c_stack.at[l, :batch, :].set(prev_h[l][1])

        h_out, c_out = self._forward(x_pad, h_stack, c_stack,
                                     self.wx0, self.w_h, self.b_packed)
        return [(h_out[l, :batch], c_out[l, :batch])
                for l in range(num_layers)]


def _reference_forward(model, x, prev_h=None, bf16_matmul=True):
    """Pure-JAX reference matching the PyTorch forward.  With bf16_matmul=True
    the matmul operands are cast to bf16 (f32 accumulate) like the kernel."""
    batch = x.shape[0]
    h_dim = model.h_dim
    if prev_h is None:
        zeros = jnp.zeros((batch, h_dim), jnp.float32)
        prev_h = [(zeros, zeros) for _ in range(model.num_layers)]

    def mm(a, w):
        if bf16_matmul:
            return jnp.dot(a.astype(jnp.bfloat16), w.astype(jnp.bfloat16),
                           preferred_element_type=jnp.float32)
        return jnp.dot(a, w)

    curr = []
    for l in range(model.num_layers):
        inp = x if l == 0 else curr[l - 1][0]
        wx, wh, b = model.params[l]
        z = mm(inp, wx) + mm(prev_h[l][0], wh) + b
        i_g = z[:, 0 * h_dim:1 * h_dim]
        f_g = z[:, 1 * h_dim:2 * h_dim]
        o_g = z[:, 2 * h_dim:3 * h_dim]
        g_g = z[:, 3 * h_dim:4 * h_dim]
        c = jax.nn.sigmoid(f_g) * prev_h[l][1] + jax.nn.sigmoid(i_g) * jnp.tanh(g_g)
        h = jax.nn.sigmoid(o_g) * jnp.tanh(c)
        curr.append((h, c))
    return curr


if __name__ == "__main__":
    key = jax.random.PRNGKey(0)
    key, kx, kh, kc, kp = jax.random.split(key, 5)

    batch, i_dim, h_dim, num_layers = 8, 64, 32, 3

    model = SeqLSTMPallas(i_dim=i_dim, h_dim=h_dim, num_layers=num_layers,
                          dropout=0.0, key=kp)

    x = jax.random.normal(kx, (batch, i_dim), jnp.float32)
    prev_h = [
        (jax.random.normal(jax.random.fold_in(kh, l), (batch, h_dim), jnp.float32),
         jax.random.normal(jax.random.fold_in(kc, l), (batch, h_dim), jnp.float32))
        for l in range(num_layers)
    ]

    out = model(x, prev_h)
    out = jax.tree_util.tree_map(jax.block_until_ready, out)

    ref_bf16 = _reference_forward(model, x, prev_h, bf16_matmul=True)
    ref_f32 = _reference_forward(model, x, prev_h, bf16_matmul=False)
    for l in range(num_layers):
        for got, want in zip(out[l], ref_bf16[l]):
            err = float(jnp.max(jnp.abs(got - want)))
            assert err < 5e-3, f"layer {l}: mismatch vs bf16 reference ({err})"
        for got, want in zip(out[l], ref_f32[l]):
            err = float(jnp.max(jnp.abs(got - want)))
            assert err < 5e-2, f"layer {l}: mismatch vs f32 reference ({err})"

    print("KERNEL_OK")
</pallas_src>

<mosaic_0001>
module attributes {stable_mosaic.version = 11 : i64} {
  func.func @kernel(%arg0: i32, %arg1: memref<8x64xbf16, #tpu.memory_space<vmem>>, %arg2: memref<64x128xbf16, #tpu.memory_space<vmem>>, %arg3: memref<1x64x128xbf16, #tpu.memory_space<vmem>>, %arg4: memref<1x1x128xf32, #tpu.memory_space<vmem>>, %arg5: memref<1x8x32xf32, #tpu.memory_space<vmem>>, %arg6: memref<1x8x32xf32, #tpu.memory_space<vmem>>, %arg7: memref<1x8x32xf32, #tpu.memory_space<vmem>>, %arg8: memref<1x8x32xf32, #tpu.memory_space<vmem>>, %arg9: memref<8x32xbf16, #tpu.memory_space<vmem>>, %arg10: memref<8x128xf32, #tpu.memory_space<vmem>>) attributes {dimension_semantics = [#tpu.dimension_semantics<arbitrary>], iteration_bounds = array<i64: 3>, scalar_prefetch = 0 : i64, scratch_operands = 2 : i64, tpu.core_type = #tpu.core_type<tc>, window_params = [{pipeline_mode = #tpu.pipeline_mode<synchronous>, transform_indices = @transform_0, window_bounds = array<i64: 8, 64>}, {pipeline_mode = #tpu.pipeline_mode<synchronous>, transform_indices = @transform_1, window_bounds = array<i64: 64, 128>}, {transform_indices = @transform_2, window_bounds = array<i64: 1, 64, 128>}, {transform_indices = @transform_3, window_bounds = array<i64: 1, 1, 128>}, {transform_indices = @transform_4, window_bounds = array<i64: 1, 8, 32>}, {transform_indices = @transform_5, window_bounds = array<i64: 1, 8, 32>}, {transform_indices = @transform_6, window_bounds = array<i64: 1, 8, 32>}, {transform_indices = @transform_7, window_bounds = array<i64: 1, 8, 32>}]} {
    %c0_i32 = arith.constant 0 : i32
    %0 = arith.cmpi eq, %arg0, %c0_i32 : i32
    %1 = arith.extui %0 : i1 to i32
    %c0_i32_0 = arith.constant 0 : i32
    %2 = arith.cmpi ne, %1, %c0_i32_0 : i32
    scf.if %2 {
      %cst_31 = arith.constant 0.000000e+00 : bf16
      %51 = vector.broadcast %cst_31 : bf16 to vector<8x32xbf16>
      %c0_32 = arith.constant 0 : index
      %c0_33 = arith.constant 0 : index
      %52 = vector.load %arg9[%c0_32, %c0_33] : memref<8x32xbf16, #tpu.memory_space<vmem>>, vector<8x32xbf16>
      tpu.vector_store %arg9[%c0_32, %c0_33], %51 {strides = array<i32>} : memref<8x32xbf16, #tpu.memory_space<vmem>>, vector<8x32xbf16>,
    } else {
    }
    %c0 = arith.constant 0 : index
    %c0_1 = arith.constant 0 : index
    %c0_2 = arith.constant 0 : index
    %3 = vector.load %arg5[%c0, %c0_1, %c0_2] : memref<1x8x32xf32, #tpu.memory_space<vmem>>, vector<1x8x32xf32>
    %4 = vector.shape_cast %3 : vector<1x8x32xf32> to vector<8x32xf32>
    %5 = arith.truncf %4 : vector<8x32xf32> to vector<8x32xbf16>
    %c0_3 = arith.constant 0 : index
    %c0_4 = arith.constant 0 : index
    %6 = vector.load %arg9[%c0_3, %c0_4] : memref<8x32xbf16, #tpu.memory_space<vmem>>, vector<8x32xbf16>
    %c0_5 = arith.constant 0 : index
    %c0_6 = arith.constant 0 : index
    %c0_7 = arith.constant 0 : index
    %7 = vector.load %arg3[%c0_5, %c0_6, %c0_7] : memref<1x64x128xbf16, #tpu.memory_space<vmem>>, vector<1x32x128xbf16>
    %8 = vector.shape_cast %7 : vector<1x32x128xbf16> to vector<32x128xbf16>
    %cst = arith.constant dense<0.000000e+00> : vector<8x128xf32>
    %9 = tpu.matmul %6, %8, %cst {dimension_numbers = #tpu.dot_dimension_numbers<[1], [0], [0], [1], [0, 0, 1, 1], [], []>} : vector<8x32xbf16>, vector<32x128xbf16>, vector<8x128xf32> -> vector<8x128xf32>
    %c0_8 = arith.constant 0 : index
    %c32 = arith.constant 32 : index
    %c0_9 = arith.constant 0 : index
    %10 = vector.load %arg3[%c0_8, %c32, %c0_9] : memref<1x64x128xbf16, #tpu.memory_space<vmem>>, vector<1x32x128xbf16>
    %11 = vector.shape_cast %10 : vector<1x32x128xbf16> to vector<32x128xbf16>
    %cst_10 = arith.constant dense<0.000000e+00> : vector<8x128xf32>
    %12 = tpu.matmul %5, %11, %cst_10 {dimension_numbers = #tpu.dot_dimension_numbers<[1], [0], [0], [1], [0, 0, 1, 1], [], []>} : vector<8x32xbf16>, vector<32x128xbf16>, vector<8x128xf32> -> vector<8x128xf32>
    %13 = arith.addf %9, %12 : vector<8x128xf32>
    %c0_11 = arith.constant 0 : index
    %c0_12 = arith.constant 0 : index
    %14 = vector.load %arg10[%c0_11, %c0_12] : memref<8x128xf32, #tpu.memory_space<vmem>>, vector<8x128xf32>
    tpu.vector_store %arg10[%c0_11, %c0_12], %13 {strides = array<i32>} : memref<8x128xf32, #tpu.memory_space<vmem>>, vector<8x128xf32>,
    %c0_i32_13 = arith.constant 0 : i32
    %15 = arith.cmpi eq, %arg0, %c0_i32_13 : i32
    %16 = arith.extui %15 : i1 to i32
    %c0_i32_14 = arith.constant 0 : i32
    %17 = arith.cmpi ne, %16, %c0_i32_14 : i32
    scf.if %17 {
      %c0_31 = arith.constant 0 : index
      %c0_32 = arith.constant 0 : index
      %51 = vector.load %arg10[%c0_31, %c0_32] : memref<8x128xf32, #tpu.memory_space<vmem>>, vector<8x128xf32>
      %c0_33 = arith.constant 0 : index
      %c0_34 = arith.constant 0 : index
      %52 = vector.load %arg1[%c0_33, %c0_34] : memref<8x64xbf16, #tpu.memory_space<vmem>>, vector<8x64xbf16>
      %c0_35 = arith.constant 0 : index
      %c0_36 = arith.constant 0 : index
      %53 = vector.load %arg2[%c0_35, %c0_36] : memref<64x128xbf16, #tpu.memory_space<vmem>>, vector<64x128xbf16>
      %cst_37 = arith.constant dense<0.000000e+00> : vector<8x128xf32>
      %54 = tpu.matmul %52, %53, %cst_37 {dimension_numbers = #tpu.dot_dimension_numbers<[1], [0], [0], [1], [0, 0, 1, 1], [], []>} : vector<8x64xbf16>, vector<64x128xbf16>, vector<8x128xf32> -> vector<8x128xf32>
      %55 = arith.addf %51, %54 : vector<8x128xf32>
      %c0_38 = arith.constant 0 : index
      %c0_39 = arith.constant 0 : index
      %56 = vector.load %arg10[%c0_38, %c0_39] : memref<8x128xf32, #tpu.memory_space<vmem>>, vector<8x128xf32>
      tpu.vector_store %arg10[%c0_38, %c0_39], %55 {strides = array<i32>} : memref<8x128xf32, #tpu.memory_space<vmem>>, vector<8x128xf32>,
    } else {
    }
    %c0_15 = arith.constant 0 : index
    %c0_16 = arith.constant 0 : index
    %18 = vector.load %arg10[%c0_15, %c0_16] : memref<8x128xf32, #tpu.memory_space<vmem>>, vector<8x128xf32>
    %c0_17 = arith.constant 0 : index
    %c0_18 = arith.constant 0 : index
    %c0_19 = arith.constant 0 : index
    %19 = vector.load %arg4[%c0_17, %c0_18, %c0_19] : memref<1x1x128xf32, #tpu.memory_space<vmem>>, vector<1x1x128xf32>
    %20 = vector.shape_cast %19 : vector<1x1x128xf32> to vector<1x128xf32>
    %21 = vector.broadcast %20 : vector<1x128xf32> to vector<8x128xf32>
    %22 = arith.addf %18, %21 : vector<8x128xf32>
    %23 = vector.extract_strided_slice %22 {offsets = [0, 0], sizes = [8, 96], strides = [1, 1]} : vector<8x128xf32> to vector<8x96xf32>
    %24 = arith.negf %23 : vector<8x96xf32>
    %25 = math.exp %24 : vector<8x96xf32>
    %cst_20 = arith.constant 1.000000e+00 : f32
    %26 = vector.broadcast %cst_20 : f32 to vector<8x96xf32>
    %27 = arith.addf %26, %25 : vector<8x96xf32>
    %28 = arith.divf %26, %27 : vector<8x96xf32>
    %29 = vector.extract_strided_slice %28 {offsets = [0, 0], sizes = [8, 32], strides = [1, 1]} : vector<8x96xf32> to vector<8x32xf32>
    %30 = vector.extract_strided_slice %28 {offsets = [0, 32], sizes = [8, 32], strides = [1, 1]} : vector<8x96xf32> to vector<8x32xf32>
    %31 = vector.extract_strided_slice %28 {offsets = [0, 64], sizes = [8, 32], strides = [1, 1]} : vector<8x96xf32> to vector<8x32xf32>
    %32 = vector.extract_strided_slice %22 {offsets = [0, 96], sizes = [8, 32], strides = [1, 1]} : vector<8x128xf32> to vector<8x32xf32>
    %33 = math.tanh %32 : vector<8x32xf32>
    %c0_21 = arith.constant 0 : index
    %c0_22 = arith.constant 0 : index
    %c0_23 = arith.constant 0 : index
    %34 = vector.load %arg6[%c0_21, %c0_22, %c0_23] : memref<1x8x32xf32, #tpu.memory_space<vmem>>, vector<1x8x32xf32>
    %35 = vector.shape_cast %34 : vector<1x8x32xf32> to vector<8x32xf32>
    %36 = arith.mulf %30, %35 : vector<8x32xf32>
    %37 = arith.mulf %29, %33 : vector<8x32xf32>
    %38 = arith.addf %36, %37 : vector<8x32xf32>
    %39 = math.tanh %38 : vector<8x32xf32>
    %40 = arith.mulf %31, %39 : vector<8x32xf32>
    %c0_24 = arith.constant 0 : index
    %c0_25 = arith.constant 0 : index
    %c0_26 = arith.constant 0 : index
    %41 = vector.load %arg7[%c0_24, %c0_25, %c0_26] : memref<1x8x32xf32, #tpu.memory_space<vmem>>, vector<1x8x32xf32>
    %42 = vector.shape_cast %41 : vector<1x8x32xf32> to vector<8x32xf32>
    %43 = vector.shape_cast %40 : vector<8x32xf32> to vector<1x8x32xf32>
    tpu.vector_store %arg7[%c0_24, %c0_25, %c0_26], %43 {strides = array<i32>} : memref<1x8x32xf32, #tpu.memory_space<vmem>>, vector<1x8x32xf32>,
    %c0_27 = arith.constant 0 : index
    %c0_28 = arith.constant 0 : index
    %c0_29 = arith.constant 0 : index
    %44 = vector.load %arg8[%c0_27, %c0_28, %c0_29] : memref<1x8x32xf32, #tpu.memory_space<vmem>>, vector<1x8x32xf32>
    %45 = vector.shape_cast %44 : vector<1x8x32xf32> to vector<8x32xf32>
    %46 = vector.shape_cast %38 : vector<8x32xf32> to vector<1x8x32xf32>
    tpu.vector_store %arg8[%c0_27, %c0_28, %c0_29], %46 {strides = array<i32>} : memref<1x8x32xf32, #tpu.memory_space<vmem>>, vector<1x8x32xf32>,
    %c1_i32 = arith.constant 1 : i32
    %47 = arith.addi %arg0, %c1_i32 : i32
    %c3_i32 = arith.constant 3 : i32
    %48 = arith.cmpi slt, %47, %c3_i32 : i32
    %49 = arith.extui %48 : i1 to i32
    %c0_i32_30 = arith.constant 0 : i32
    %50 = arith.cmpi ne, %49, %c0_i32_30 : i32
    scf.if %50 {
      %51 = arith.truncf %40 : vector<8x32xf32> to vector<8x32xbf16>
      %c0_31 = arith.constant 0 : index
      %c0_32 = arith.constant 0 : index
      %52 = vector.load %arg9[%c0_31, %c0_32] : memref<8x32xbf16, #tpu.memory_space<vmem>>, vector<8x32xbf16>
      tpu.vector_store %arg9[%c0_31, %c0_32], %51 {strides = array<i32>} : memref<8x32xbf16, #tpu.memory_space<vmem>>, vector<8x32xbf16>,
    } else {
    }
    return
  }
  func.func @transform_0(%arg0: i32) -> (i32, i32) {
    %c0_i32 = arith.constant 0 : i32
    %c0_i32_0 = arith.constant 0 : i32
    %c0_i32_1 = arith.constant 0 : i32
    return %c0_i32, %c0_i32_0 : i32, i32
  }
  func.func @transform_1(%arg0: i32) -> (i32, i32) {
    %c0_i32 = arith.constant 0 : i32
    %c0_i32_0 = arith.constant 0 : i32
    %c0_i32_1 = arith.constant 0 : i32
    return %c0_i32, %c0_i32_0 : i32, i32
  }
  func.func @transform_2(%arg0: i32) -> (i32, i32, i32) {
    %c0_i32 = arith.constant 0 : i32
    %c0_i32_0 = arith.constant 0 : i32
    %c0_i32_1 = arith.constant 0 : i32
    return %arg0, %c0_i32, %c0_i32_0 : i32, i32, i32
  }
  func.func @transform_3(%arg0: i32) -> (i32, i32, i32) {
    %c0_i32 = arith.constant 0 : i32
    %c0_i32_0 = arith.constant 0 : i32
    %c0_i32_1 = arith.constant 0 : i32
    return %arg0, %c0_i32, %c0_i32_0 : i32, i32, i32
  }
  func.func @transform_4(%arg0: i32) -> (i32, i32, i32) {
    %c0_i32 = arith.constant 0 : i32
    %c0_i32_0 = arith.constant 0 : i32
    %c0_i32_1 = arith.constant 0 : i32
    return %arg0, %c0_i32, %c0_i32_0 : i32, i32, i32
  }
  func.func @transform_5(%arg0: i32) -> (i32, i32, i32) {
    %c0_i32 = arith.constant 0 : i32
    %c0_i32_0 = arith.constant 0 : i32
    %c0_i32_1 = arith.constant 0 : i32
    return %arg0, %c0_i32, %c0_i32_0 : i32, i32, i32
  }
  func.func @transform_6(%arg0: i32) -> (i32, i32, i32) {
    %c0_i32 = arith.constant 0 : i32
    %c0_i32_0 = arith.constant 0 : i32
    %c0_i32_1 = arith.constant 0 : i32
    return %arg0, %c0_i32, %c0_i32_0 : i32, i32, i32
  }
  func.func @transform_7(%arg0: i32) -> (i32, i32, i32) {
    %c0_i32 = arith.constant 0 : i32
    %c0_i32_0 = arith.constant 0 : i32
    %c0_i32_1 = arith.constant 0 : i32
    return %arg0, %c0_i32, %c0_i32_0 : i32, i32, i32
  }
}

</mosaic_0001>

<llo_original>
// kernel: _fused_forward.1
$region0: #{_fused_forward.1}
  #allocation0 [shape = 'u32[]', space=smem, size = 0x4, offset = 0x4, fixed_abs, tag = 'smem constant byte address 0x4 - core index']
  #allocation1 [shape = 'u32[72,128]{1,0:T(1,128)}', space=vmem, size = 0x9000, scoped, tag = 'internal scratch']
  #allocation2 [shape = 'bf16[8,32]{1,0:T(8,128)(2,1)}', space=vmem, size = 0x800, scoped, tag = 'scratch operand']
  #allocation3 [shape = 'f32[8,128]{1,0:T(8,128)}', space=vmem, size = 0x1000, scoped, tag = 'scratch operand']
  %s0 = inlined_call_operand.hbm [shape: bf16[8,64], index: 0, kind: input, shape index: {}]
  %s1 = inlined_call_operand.hbm [shape: bf16[64,128], index: 1, kind: input, shape index: {}]
  %s2 = inlined_call_operand.hbm [shape: bf16[3,64,128], index: 2, kind: input, shape index: {}]
  %s3 = inlined_call_operand.vmem [shape: f32[3,1,128], index: 3, kind: input, shape index: {}]
  %s4 = inlined_call_operand.hbm [shape: f32[3,8,32], index: 4, kind: input, shape index: {}]
  %s5 = inlined_call_operand.hbm [shape: f32[3,8,32], index: 5, kind: input, shape index: {}]
  %s6 = inlined_call_operand.hbm [shape: f32[3,8,32], index: 6, kind: output, shape index: {0}]
  %s7 = inlined_call_operand.hbm [shape: f32[3,8,32], index: 7, kind: output, shape index: {1}]
  %8 = xla_tuple %s6, %s7
  %s9 = sld [smem:[#allocation0]]
  $region97: #{_fused_forward.1} parent=0
    _
  %s11 = ssub.s32 1, %s9
  %s12 = scalar_select 0, %s11, %s9
  $region1: #{_fused_forward.1} parent=0
    #allocation4 [shape = 'u8[2048]{0}', space=vmem, size = 0x800, scoped, tag = 'input window, operand 0, single buffered']
    #allocation5 [shape = 's32[2]{0}', space=sflag, size = 0x8, scoped, tag = 'scoped memory for _fused_forward.1']
    #allocation6 [shape = 's32[2]{0}', space=sflag, size = 0x8, scoped, tag = 'scoped memory for _fused_forward.1']
    #allocation7 [shape = 'u8[16384]{0}', space=vmem, size = 0x4000, scoped, tag = 'input window, operand 1, single buffered']
    #allocation8 [shape = 's32[1]{0}', space=sflag, size = 0x4, scoped, tag = 'scoped memory for _fused_forward.1']
    #allocation9 [shape = 'u8[32768]{0}', space=vmem, size = 0x8000, scoped, tag = 'input window, operand 2']
    #allocation10 [shape = 'u8[8192]{0}', space=vmem, size = 0x2000, scoped, tag = 'input window, operand 4']
    #allocation11 [shape = 'u8[8192]{0}', space=vmem, size = 0x2000, scoped, tag = 'input window, operand 5']
    #allocation12 [shape = 'u8[8192]{0}', space=vmem, size = 0x2000, scoped, tag = 'output window, operand 0']
    #allocation13 [shape = 'u8[8192]{0}', space=vmem, size = 0x2000, scoped, tag = 'output window, operand 1']
    #allocation14 [shape = 's32[2]{0}', space=sflag, size = 0x8, scoped, tag = 'scoped memory for _fused_forward.1']
    %13 = vsyncpa [#allocation5], 0
    %14 = vsyncpa [#allocation8], 0
    %15 = vsyncpa [#allocation6], 0
    %s16 = scalar_lea.sflag [#allocation6], 1
    %17 = vsyncpa %s16, 0
    %18 = vsyncpa [#allocation14], 0
    %s19 = scalar_lea.sflag [#allocation14], 1
    %20 = vsyncpa %s19, 0
    loop: start=0, step=1, limit=5
    $region2: #{_fused_forward.1} parent=1 // loop_pre_header
      _
    $region3: #{_fused_forward.1} parent=1 // loop_header
      %s22 = sphi 0, %s26
      %p23 = scmp.ge.s32.totalorder %s22, 5
      %s30 = sphi 0, %s30
      %s32 = sphi 0, %s30
      %s33 = sphi 0, %s32
      %s47 = sphi 0, %s33
      %s51 = sphi 0, %s51
      %s53 = sphi 0, %s51
      %s54 = sphi 0, %s53
      %s68 = sphi 0, %s54
      %s74 = sphi 0, %s76
      %s77 = sphi 0, %s74
      %s78 = sphi 0, %s77
      %s94 = sphi 0, %s78
      %s100 = sphi 0, %s102
      %s103 = sphi 0, %s100
      %s104 = sphi 0, %s103
      %s120 = sphi 0, %s104
      %s126 = sphi 0, %s128
      %s129 = sphi 0, %s126
      %s130 = sphi 0, %s129
      %s146 = sphi 0, %s130
      %s152 = sphi 0, %s154
      %s155 = sphi 0, %s152
      %s156 = sphi 0, %s155
      %s172 = sphi 0, %s156
      %s178 = sphi 0, %s180
      %s181 = sphi 0, %s178
      %s182 = sphi 0, %s181
      %s198 = sphi 0, %s182
      %s204 = sphi 0, %s206
      %s207 = sphi 0, %s204
      %s208 = sphi 0, %s207
      %s224 = sphi 0, %s208
    $region4: #{_fused_forward.1} parent=1 // loop_header_branch
      %25 = sbr.rel (%p23) target = $region8
    $region5: #{_fused_forward.1} parent=1 // loop_body
      %s27 = ssub.s32 %s22, 1
      %s28 = ssub.s32 %s22, 2
      %s29 = sadd.s32 %s22, 1
      %s31 = sadd.s32 %s30, 1
      %p34 = scmp.eq.s32.totalorder %s22, 2
      %p35 = scmp.ne.s32.totalorder %s30, %s32
      %p36 = scmp.eq.s32.totalorder %s22, 0
      %p37 = por %p35, %p36
      %p38 = scmp.ne.s32.totalorder %s30, %s32
      %p39 = scmp.eq.s32.totalorder %s27, 2
      %p40 = por %p38, %p39
      %p41 = scmp.ne.s32.totalorder %s32, %s33
      %p42 = scmp.eq.s32.totalorder %s27, 0
      %p43 = por %p41, %p42
      %p44 = scmp.ne.s32.totalorder %s32, %s33
      %p45 = scmp.eq.s32.totalorder %s28, 2
      %p46 = por %p44, %p45
      %p48 = scmp.ne.s32.totalorder %s33, %s47
      %p49 = scmp.eq.s32.totalorder %s28, 0
      %p50 = por %p48, %p49
      %s52 = sadd.s32 %s51, 1
      %p55 = scmp.eq.s32.totalorder %s22, 2
      %p56 = scmp.ne.s32.totalorder %s51, %s53
      %p57 = scmp.eq.s32.totalorder %s22, 0
      %p58 = por %p56, %p57
      %p59 = scmp.ne.s32.totalorder %s51, %s53
      %p60 = scmp.eq.s32.totalorder %s27, 2
      %p61 = por %p59, %p60
      %p62 = scmp.ne.s32.totalorder %s53, %s54
      %p63 = scmp.eq.s32.totalorder %s27, 0
      %p64 = por %p62, %p63
      %p65 = scmp.ne.s32.totalorder %s53, %s54
      %p66 = scmp.eq.s32.totalorder %s28, 2
      %p67 = por %p65, %p66
      %p69 = scmp.ne.s32.totalorder %s54, %s68
      %p70 = scmp.eq.s32.totalorder %s28, 0
      %p71 = por %p69, %p70
      %s72 = ssub.s32 %s22, %s29
      %p73 = scmp.eq.s32.totalorder %s72, 0
      %s75 = sadd.s32 %s74, 1
      %s76 = scalar_select %p73, %s74, %s75
      %p79 = pneg %p73
      %p80 = scmp.eq.s32.totalorder %s22, 2
      %p81 = por %p79, %p80
      %p82 = scmp.ne.s32.totalorder %s74, %s77
      %p83 = scmp.eq.s32.totalorder %s22, 0
      %p84 = por %p82, %p83
      %p85 = scmp.ne.s32.totalorder %s74, %s77
      %p86 = scmp.eq.s32.totalorder %s27, 2
      %p87 = por %p85, %p86
      %p88 = scmp.ne.s32.totalorder %s77, %s78
      %p89 = scmp.eq.s32.totalorder %s27, 0
      %p90 = por %p88, %p89
      %p91 = scmp.ne.s32.totalorder %s77, %s78
      %p92 = scmp.eq.s32.totalorder %s28, 2
      %p93 = por %p91, %p92
      %p95 = scmp.ne.s32.totalorder %s78, %s94
      %p96 = scmp.eq.s32.totalorder %s28, 0
      %p97 = por %p95, %p96
      %s98 = ssub.s32 %s22, %s29
      %p99 = scmp.eq.s32.totalorder %s98, 0
      %s101 = sadd.s32 %s100, 1
      %s102 = scalar_select %p99, %s100, %s101
      %p105 = pneg %p99
      %p106 = scmp.eq.s32.totalorder %s22, 2
      %p107 = por %p105, %p106
      %p108 = scmp.ne.s32.totalorder %s100, %s103
      %p109 = scmp.eq.s32.totalorder %s22, 0
      %p110 = por %p108, %p109
      %p111 = scmp.ne.s32.totalorder %s100, %s103
      %p112 = scmp.eq.s32.totalorder %s27, 2
      %p113 = por %p111, %p112
      %p114 = scmp.ne.s32.totalorder %s103, %s104
      %p115 = scmp.eq.s32.totalorder %s27, 0
      %p116 = por %p114, %p115
      %p117 = scmp.ne.s32.totalorder %s103, %s104
      %p118 = scmp.eq.s32.totalorder %s28, 2
      %p119 = por %p117, %p118
      %p121 = scmp.ne.s32.totalorder %s104, %s120
      %p122 = scmp.eq.s32.totalorder %s28, 0
      %p123 = por %p121, %p122
      %s124 = ssub.s32 %s22, %s29
      %p125 = scmp.eq.s32.totalorder %s124, 0
      %s127 = sadd.s32 %s126, 1
      %s128 = scalar_select %p125, %s126, %s127
      %p131 = pneg %p125
      %p132 = scmp.eq.s32.totalorder %s22, 2
      %p133 = por %p131, %p132
      %p134 = scmp.ne.s32.totalorder %s126, %s129
      %p135 = scmp.eq.s32.totalorder %s22, 0
      %p136 = por %p134, %p135
      %p137 = scmp.ne.s32.totalorder %s126, %s129
      %p138 = scmp.eq.s32.totalorder %s27, 2
      %p139 = por %p137, %p138
      %p140 = scmp.ne.s32.totalorder %s129, %s130
      %p141 = scmp.eq.s32.totalorder %s27, 0
      %p142 = por %p140, %p141
      %p143 = scmp.ne.s32.totalorder %s129, %s130
      %p144 = scmp.eq.s32.totalorder %s28, 2
      %p145 = por %p143, %p144
      %p147 = scmp.ne.s32.totalorder %s130, %s146
      %p148 = scmp.eq.s32.totalorder %s28, 0
      %p149 = por %p147, %p148
      %s150 = ssub.s32 %s22, %s29
      %p151 = scmp.eq.s32.totalorder %s150, 0
      %s153 = sadd.s32 %s152, 1
      %s154 = scalar_select %p151, %s152, %s153
      %p157 = pneg %p151
      %p158 = scmp.eq.s32.totalorder %s22, 2
      %p159 = por %p157, %p158
      %p160 = scmp.ne.s32.totalorder %s152, %s155
      %p161 = scmp.eq.s32.totalorder %s22, 0
      %p162 = por %p160, %p161
      %p163 = scmp.ne.s32.totalorder %s152, %s155
      %p164 = scmp.eq.s32.totalorder %s27, 2
      %p165 = por %p163, %p164
      %p166 = scmp.ne.s32.totalorder %s155, %s156
      %p167 = scmp.eq.s32.totalorder %s27, 0
      %p168 = por %p166, %p167
      %p169 = scmp.ne.s32.totalorder %s155, %s156
      %p170 = scmp.eq.s32.totalorder %s28, 2
      %p171 = por %p169, %p170
      %p173 = scmp.ne.s32.totalorder %s156, %s172
      %p174 = scmp.eq.s32.totalorder %s28, 0
      %p175 = por %p173, %p174
      %s176 = ssub.s32 %s22, %s29
      %p177 = scmp.eq.s32.totalorder %s176, 0
      %s179 = sadd.s32 %s178, 1
      %s180 = scalar_select %p177, %s178, %s179
      %p183 = pneg %p177
      %p184 = scmp.eq.s32.totalorder %s22, 2
      %p185 = por %p183, %p184
      %p186 = scmp.ne.s32.totalorder %s178, %s181
      %p187 = scmp.eq.s32.totalorder %s22, 0
      %p188 = por %p186, %p187
      %p189 = scmp.ne.s32.totalorder %s178, %s181
      %p190 = scmp.eq.s32.totalorder %s27, 2
      %p191 = por %p189, %p190
      %p192 = scmp.ne.s32.totalorder %s181, %s182
      %p193 = scmp.eq.s32.totalorder %s27, 0
      %p194 = por %p192, %p193
      %p195 = scmp.ne.s32.totalorder %s181, %s182
      %p196 = scmp.eq.s32.totalorder %s28, 2
      %p197 = por %p195, %p196
      %p199 = scmp.ne.s32.totalorder %s182, %s198
      %p200 = scmp.eq.s32.totalorder %s28, 0
      %p201 = por %p199, %p200
      %s202 = ssub.s32 %s22, %s29
      %p203 = scmp.eq.s32.totalorder %s202, 0
      %s205 = sadd.s32 %s204, 1
      %s206 = scalar_select %p203, %s204, %s205
      %p209 = pneg %p203
      %p210 = scmp.eq.s32.totalorder %s22, 2
      %p211 = por %p209, %p210
      %p212 = scmp.ne.s32.totalorder %s204, %s207
      %p213 = scmp.eq.s32.totalorder %s22, 0
      %p214 = por %p212, %p213
      %p215 = scmp.ne.s32.totalorder %s204, %s207
      %p216 = scmp.eq.s32.totalorder %s27, 2
      %p217 = por %p215, %p216
      %p218 = scmp.ne.s32.totalorder %s207, %s208
      %p219 = scmp.eq.s32.totalorder %s27, 0
      %p220 = por %p218, %p219
      %p221 = scmp.ne.s32.totalorder %s207, %s208
      %p222 = scmp.eq.s32.totalorder %s28, 2
      %p223 = por %p221, %p222
      %p225 = scmp.ne.s32.totalorder %s208, %s224
      %p226 = scmp.eq.s32.totalorder %s28, 0
      %p227 = por %p225, %p226
      %p228 = scmp.le.s32.totalorder 1, %s22
      %p229 = scmp.lt.s32.totalorder %s22, 4
      %p230 = pnand %p228, %p229
      %p231 = pneg %p230
      // Predicated region
      $region9: #{_fused_forward.1} parent=5 // pred_check
        _
      $region10: #{_fused_forward.1} parent=5 // pred_check_branch
        %233 = sbr.rel (%p230) target = $region12
      $region11: #{_fused_forward.1} parent=5 // pred_region
        %s234 = ssub.s32 %s22, 1
        // Predicated region
        $region13: #{_fused_forward.1} parent=11 // pred_check
          %p235 = pneg %p43
        $region14: #{_fused_forward.1} parent=11 // pred_check_branch
          %237 = sbr.rel (%p235) target = $region16
        $region15: #{_fused_forward.1} parent=11 // pred_region
          %239 = vsyncadd [#allocation5], 0
          %s241 = sshll.u32 %s0, 4
          %s242 = int_to_ptr.hbm [resolvable:$true] %s241
          %s243 = sshll.u32 [#allocation4], 4
          %s244 = int_to_ptr.vmem [resolvable:$true] %s243
          %246 = dma.hbm_to_vmem [thread:$0]  %s242, 64, %s244, [#allocation5]
        $region16: #{_fused_forward.1} parent=11 // pred_fallthru
          _
        // Predicated region
        $region17: #{_fused_forward.1} parent=11 // pred_check
          %p247 = pneg %p64
        $region18: #{_fused_forward.1} parent=11 // pred_check_branch
          %249 = sbr.rel (%p247) target = $region20
        $region19: #{_fused_forward.1} parent=11 // pred_region
          %251 = vsyncadd [#allocation8], 0
          %s252 = sshll.u32 %s1, 4
          %s253 = int_to_ptr.hbm [resolvable:$true] %s252
          %s254 = sshll.u32 [#allocation7], 4
          %s255 = int_to_ptr.vmem [resolvable:$true] %s254
          %260 = dma.hbm_to_vmem [thread:$0]  %s253, 512, %s255, [#allocation8], 64, 64, 4
        $region20: #{_fused_forward.1} parent=11 // pred_fallthru
          _
      $region12: #{_fused_forward.1} parent=5 // pred_fallthru
        _
      %p261 = scmp.lt.s32.totalorder %s22, 3
      // Predicated region
      $region21: #{_fused_forward.1} parent=5 // pred_check
        %p262 = pneg %p261
      $region22: #{_fused_forward.1} parent=5 // pred_check_branch
        %264 = sbr.rel (%p262) target = $region24
      $region23: #{_fused_forward.1} parent=5 // pred_region
        // Predicated region
        $region25: #{_fused_forward.1} parent=23 // pred_check
          %p265 = pneg %p84
        $region26: #{_fused_forward.1} parent=23 // pred_check_branch
          %267 = sbr.rel (%p265) target = $region28
        $region27: #{_fused_forward.1} parent=23 // pred_region
          %s268 = sand.u32 %s22, 1
          %s269 = scalar_lea.sflag [#allocation5], %s268
          %s270 = sand.u32 %s74, 1
          %s271 = smul.addr %s270, 32
          %s272 = scalar_lea.vmem [#allocation9], %s271
          %274 = vsyncadd %s269, 0
          %s275 = smul.addr %s22, 8
          %s276 = smul.addr %s275, 4
          %s277 = scalar_lea.hbm %s2, %s276
          %s278 = sshll.u32 %s277, 4
          %s279 = int_to_ptr.hbm [resolvable:$true] %s278
          %s280 = sshll.u32 %s272, 4
          %s281 = int_to_ptr.vmem [resolvable:$true] %s280
          %286 = dma.hbm_to_vmem [thread:$0]  %s279, 512, %s281, %s269, 64, 64, 4
        $region28: #{_fused_forward.1} parent=23 // pred_fallthru
          _
        // Predicated region
        $region29: #{_fused_forward.1} parent=23 // pred_check
          %p287 = pneg %p110
        $region30: #{_fused_forward.1} parent=23 // pred_check_branch
          %289 = sbr.rel (%p287) target = $region32
        $region31: #{_fused_forward.1} parent=23 // pred_region
          %p290 = scmp.lt.s32.totalorder %s22, 2
          %s291 = scalar_select %p290, %s22, 2
          %s292 = scalar_lea.vmem %s3, %s291
        $region32: #{_fused_forward.1} parent=23 // pred_fallthru
          _
        // Predicated region
        $region33: #{_fused_forward.1} parent=23 // pred_check
          %p293 = pneg %p136
        $region34: #{_fused_forward.1} parent=23 // pred_check_branch
          %295 = sbr.rel (%p293) target = $region36
        $region35: #{_fused_forward.1} parent=23 // pred_region
          %s296 = sand.u32 %s22, 1
          %s297 = scalar_lea.sflag [#allocation5], %s296
          %s298 = sand.u32 %s126, 1
          %s299 = smul.addr %s298, 8
          %s300 = scalar_lea.vmem [#allocation10], %s299
          %302 = vsyncadd %s297, 0
          %s303 = smul.addr %s22, 8
          %s304 = scalar_lea.hbm %s4, %s303
          %s306 = sshll.u32 %s304, 4
          %s307 = int_to_ptr.hbm [resolvable:$true] %s306
          %s308 = sshll.u32 %s300, 4
          %s309 = int_to_ptr.vmem [resolvable:$true] %s308
          %311 = dma.hbm_to_vmem [thread:$0]  %s307, 128, %s309, %s297
        $region36: #{_fused_forward.1} parent=23 // pred_fallthru
          _
        // Predicated region
        $region37: #{_fused_forward.1} parent=23 // pred_check
          %p312 = pneg %p162
        $region38: #{_fused_forward.1} parent=23 // pred_check_branch
          %314 = sbr.rel (%p312) target = $region40
        $region39: #{_fused_forward.1} parent=23 // pred_region
          %s315 = sand.u32 %s22, 1
          %s316 = scalar_lea.sflag [#allocation5], %s315
          %s317 = sand.u32 %s152, 1
          %s318 = smul.addr %s317, 8
          %s319 = scalar_lea.vmem [#allocation11], %s318
          %321 = vsyncadd %s316, 0
          %s322 = smul.addr %s22, 8
          %s323 = scalar_lea.hbm %s5, %s322
          %s325 = sshll.u32 %s323, 4
          %s326 = int_to_ptr.hbm [resolvable:$true] %s325
          %s327 = sshll.u32 %s319, 4
          %s328 = int_to_ptr.vmem [resolvable:$true] %s327
          %330 = dma.hbm_to_vmem [thread:$0]  %s326, 128, %s328, %s316
        $region40: #{_fused_forward.1} parent=23 // pred_fallthru
          _
      $region24: #{_fused_forward.1} parent=5 // pred_fallthru
        _
      %p331 = scmp.le.s32.totalorder 1, %s22
      %p332 = scmp.lt.s32.totalorder %s22, 4
      %p333 = pnand %p331, %p332
      %p334 = pneg %p333
      // Predicated region
      $region41: #{_fused_forward.1} parent=5 // pred_check
        _
      $region42: #{_fused_forward.1} parent=5 // pred_check_branch
        %336 = sbr.rel (%p333) target = $region44
      $region43: #{_fused_forward.1} parent=5 // pred_region
        %s337 = ssub.s32 %s22, 1
        // Predicated region
        $region45: #{_fused_forward.1} parent=43 // pred_check
          %p338 = pneg %p43
        $region46: #{_fused_forward.1} parent=43 // pred_check_branch
          %340 = sbr.rel (%p338) target = $region48
        $region47: #{_fused_forward.1} parent=43 // pred_region
          %342 = dma.done [#allocation5], 64
        $region48: #{_fused_forward.1} parent=43 // pred_fallthru
          _
        // Predicated region
        $region49: #{_fused_forward.1} parent=43 // pred_check
          %p343 = pneg %p64
        $region50: #{_fused_forward.1} parent=43 // pred_check_branch
          %345 = sbr.rel (%p343) target = $region52
        $region51: #{_fused_forward.1} parent=43 // pred_region
          %347 = dma.done [#allocation8], 512
        $region52: #{_fused_forward.1} parent=43 // pred_fallthru
          _
        %s348 = sand.u32 %s27, 1
        %s349 = scalar_lea.sflag [#allocation5], %s348
        %s350 = sand.u32 %s77, 1
        %s351 = smul.addr %s350, 32
        %s352 = scalar_lea.vmem [#allocation9], %s351
        // Predicated region
        $region53: #{_fused_forward.1} parent=43 // pred_check
          %p353 = pneg %p90
        $region54: #{_fused_forward.1} parent=43 // pred_check_branch
          %355 = sbr.rel (%p353) target = $region56
        $region55: #{_fused_forward.1} parent=43 // pred_region
          %357 = dma.done %s349, 512
        $region56: #{_fused_forward.1} parent=43 // pred_fallthru
          _
        %s358 = sand.u32 %s27, 1
        %s359 = scalar_lea.sflag [#allocation5], %s358
        %s360 = sand.u32 %s129, 1
        %s361 = smul.addr %s360, 8
        %s362 = scalar_lea.vmem [#allocation10], %s361
        // Predicated region
        $region57: #{_fused_forward.1} parent=43 // pred_check
          %p363 = pneg %p142
        $region58: #{_fused_forward.1} parent=43 // pred_check_branch
          %365 = sbr.rel (%p363) target = $region60
        $region59: #{_fused_forward.1} parent=43 // pred_region
          %367 = dma.done %s359, 128
        $region60: #{_fused_forward.1} parent=43 // pred_fallthru
          _
        %s368 = sand.u32 %s27, 1
        %s369 = scalar_lea.sflag [#allocation5], %s368
        %s370 = sand.u32 %s155, 1
        %s371 = smul.addr %s370, 8
        %s372 = scalar_lea.vmem [#allocation11], %s371
        // Predicated region
        $region61: #{_fused_forward.1} parent=43 // pred_check
          %p373 = pneg %p168
        $region62: #{_fused_forward.1} parent=43 // pred_check_branch
          %375 = sbr.rel (%p373) target = $region64
        $region63: #{_fused_forward.1} parent=43 // pred_region
          %377 = dma.done %s369, 128
        $region64: #{_fused_forward.1} parent=43 // pred_fallthru
          _
        %p378 = pneg %p43
        %p379 = pneg %p40
        %p380 = pneg %p64
        %p381 = pneg %p61
        %s382 = sand.u32 %s27, 1
        %s383 = scalar_lea.sflag [#allocation5], %s382
        %s384 = sand.u32 %s77, 1
        %s385 = smul.addr %s384, 32
        %s386 = scalar_lea.vmem [#allocation9], %s385
        %p387 = pneg %p90
        %p388 = pneg %p87
        %p389 = scmp.lt.s32.totalorder %s27, 2
        %s390 = scalar_select %p389, %s27, 2
        %s391 = scalar_lea.vmem %s3, %s390
        %p392 = pneg %p116
        %p393 = pneg %p113
        %s394 = sand.u32 %s27, 1
        %s395 = scalar_lea.sflag [#allocation5], %s394
        %s396 = sand.u32 %s129, 1
        %s397 = smul.addr %s396, 8
        %s398 = scalar_lea.vmem [#allocation10], %s397
        %p399 = pneg %p142
        %p400 = pneg %p139
        %s401 = sand.u32 %s27, 1
        %s402 = scalar_lea.sflag [#allocation5], %s401
        %s403 = sand.u32 %s155, 1
        %s404 = smul.addr %s403, 8
        %s405 = scalar_lea.vmem [#allocation11], %s404
        %p406 = pneg %p168
        %p407 = pneg %p165
        %p408 = pneg %p194
        %p409 = pneg %p191
        %s410 = sand.u32 %s181, 1
        %s411 = scalar_lea.sflag [#allocation6], %s410
        %s412 = sand.u32 %s181, 1
        %s413 = smul.addr %s412, 8
        %s414 = scalar_lea.vmem [#allocation12], %s413
        %p415 = pneg %p220
        %p416 = pneg %p217
        %s417 = sand.u32 %s207, 1
        %s418 = scalar_lea.sflag [#allocation14], %s417
        %s419 = sand.u32 %s207, 1
        %s420 = smul.addr %s419, 8
        %s421 = scalar_lea.vmem [#allocation13], %s420
        %p422 = scmp.lt.s32.totalorder %s27, 2
        %s423 = scalar_select %p422, %s27, 2
        %s424 = scalar_lea.vmem %s3, %s423
        %p426 = scmp.eq.s32.totalorder %s27, 0
        // Predicated region
        $region65: #{_fused_forward.1} parent=43 // pred_check
          %p427 = pneg %p426
        $region66: #{_fused_forward.1} parent=43 // pred_check_branch
          %429 = sbr.rel (%p427) target = $region68
        $region67: #{_fused_forward.1} parent=43 // pred_region
          %vm430 = vcmask 257024
          %431 = vst.msk [vmem:[#allocation2] sm:$0xf] %vm430, 0
        $region68: #{_fused_forward.1} parent=43 // pred_fallthru
          _
        %v432 = vld [vmem:[%s362] sm:$0xff]
        %v433 = vpack.c.bf16 %v432, %v432
        %v434 = vld [vmem:[#allocation2] sm:$0xf]
        %v435 = vld [vmem:[%s352] sm:$0xf]
        %v436 = vld [vmem:[%s352 + $0x4] sm:$0xf]
        %v437 = vld [vmem:[%s352 + $0x8] sm:$0xf]
        %v438 = vld [vmem:[%s352 + $0xc] sm:$0xf]
        %v439 = vld [vmem:[%s352 + $0x10] sm:$0xf]
        %v440 = vld [vmem:[%s352 + $0x14] sm:$0xf]
        %v441 = vld [vmem:[%s352 + $0x18] sm:$0xf]
        %v442 = vld [vmem:[%s352 + $0x1c] sm:$0xf]
        %v447 = vunpack.c.l.b16 %v439
        %v448 = vunpack.c.l.b16 %v440
        %v449 = vunpack.c.l.b16 %v441
        %v450 = vunpack.c.l.b16 %v442
        %v451 = vpack.c.b16 %v448, %v447
        %v452 = vpack.c.b16 %v450, %v449
        %vm455 = vcmask 261120
        %v457 = vsel %vm455, %v433, 0
        %459 = vmatpush.bf16.msra.mxu0 0
        %460 = vmatpush.bf16.msra.mxu0 0
        %461 = vmatpush.bf16.msra.mxu0 0
        %462 = vmatpush.bf16.msra.mxu0 0
        %463 = vmatpush.bf16.msra.mxu0 0
        %464 = vmatpush.bf16.msra.mxu0 0
        %465 = vmatpush.bf16.msra.mxu0 %v452
        %466 = vmatpush.bf16.msra.mxu0 %v451
        %467 = vmatmul.bf16.gmra.mxu0 %v457
        %v468 = vpop.f32.mrf.mxu0
        %v469 = vadd.f32 0.0, %v468
        %v470 = vpop.f32.mrf.mxu0
        %471 = vdwg.mxu0
        %v476 = vunpack.c.l.b16 %v435
        %v477 = vunpack.c.l.b16 %v436
        %v478 = vunpack.c.l.b16 %v437
        %v479 = vunpack.c.l.b16 %v438
        %v480 = vpack.c.b16 %v477, %v476
        %v481 = vpack.c.b16 %v479, %v478
        %v485 = vsel %vm455, %v434, 0
        %487 = vmatpush.bf16.msra.mxu0 0
        %488 = vmatpush.bf16.msra.mxu0 0
        %489 = vmatpush.bf16.msra.mxu0 0
        %490 = vmatpush.bf16.msra.mxu0 0
        %491 = vmatpush.bf16.msra.mxu0 0
        %492 = vmatpush.bf16.msra.mxu0 0
        %493 = vmatpush.bf16.msra.mxu0 %v481
        %494 = vmatpush.bf16.msra.mxu0 %v480
        %495 = vmatmul.bf16.gmra.mxu0 %v485
        %v496 = vpop.f32.mrf.mxu0
        %v497 = vadd.f32 %v469, %v496
        %v498 = vpop.f32.mrf.mxu0
        %499 = vdwg.mxu0
        %500 = vst [vmem:[#allocation3] sm:$0xff] %v497
        // Predicated region
        $region69: #{_fused_forward.1} parent=43 // pred_check
          %p501 = pneg %p426
        $region70: #{_fused_forward.1} parent=43 // pred_check_branch
          %503 = sbr.rel (%p501) target = $region72
        $region71: #{_fused_forward.1} parent=43 // pred_region
          %v504 = vld [vmem:[#allocation3] sm:$0xff]
          %v505 = vld [vmem:[#allocation4] sm:$0xf]
          %v506 = vld [vmem:[#allocation7] sm:$0xf]
          %v507 = vld [vmem:[#allocation7 + $0x4] sm:$0xf]
          %v508 = vld [vmem:[#allocation7 + $0x8] sm:$0xf]
          %v509 = vld [vmem:[#allocation7 + $0xc] sm:$0xf]
          %v510 = vld [vmem:[#allocation7 + $0x10] sm:$0xf]
          %v511 = vld [vmem:[#allocation7 + $0x14] sm:$0xf]
          %v512 = vld [vmem:[#allocation7 + $0x18] sm:$0xf]
          %v513 = vld [vmem:[#allocation7 + $0x1c] sm:$0xf]
          %v522 = vunpack.c.l.b16 %v506
          %v523 = vunpack.c.l.b16 %v507
          %v524 = vunpack.c.l.b16 %v508
          %v525 = vunpack.c.l.b16 %v509
          %v526 = vunpack.c.l.b16 %v510
          %v527 = vunpack.c.l.b16 %v511
          %v528 = vunpack.c.l.b16 %v512
          %v529 = vunpack.c.l.b16 %v513
          %v530 = vpack.c.b16 %v523, %v522
          %v531 = vpack.c.b16 %v525, %v524
          %v532 = vpack.c.b16 %v527, %v526
          %v533 = vpack.c.b16 %v529, %v528
          %vm538 = vcmask 523264
          %v540 = vsel %vm538, %v505, 0
          %542 = vmatpush.bf16.msra.mxu0 0
          %543 = vmatpush.bf16.msra.mxu0 0
          %544 = vmatpush.bf16.msra.mxu0 0
          %545 = vmatpush.bf16.msra.mxu0 0
          %546 = vmatpush.bf16.msra.mxu0 %v533
          %547 = vmatpush.bf16.msra.mxu0 %v532
          %548 = vmatpush.bf16.msra.mxu0 %v531
          %549 = vmatpush.bf16.msra.mxu0 %v530
          %550 = vmatmul.bf16.gmra.mxu0 %v540
          %v551 = vpop.f32.mrf.mxu0
          %v552 = vadd.f32 0.0, %v551
          %v553 = vpop.f32.mrf.mxu0
          %554 = vdwg.mxu0
          %v555 = vadd.f32 %v504, %v552
          %556 = vst [vmem:[#allocation3] sm:$0xff] %v555
        $region72: #{_fused_forward.1} parent=43 // pred_fallthru
          _
        %v557 = vld [vmem:[#allocation3] sm:$0xff]
        %v558 = vld [vmem:[%s424] sm:$0x1]
        %v560 = vperm.slane %v558, 0
        %v562 = vadd.f32 %v557, %v560
        %v563 = vxor.u32 %v562, 2147483648
        %v564 = vmul.f32 %v563, 1.442695
        %v565 = vpow.pop %v564
        %v566 = vadd.f32 %v565, 1.0
        %v567 = vrcp.pop %v566
        %v568 = vmul.f32 %v566, %v567
        %v569 = vsub.f32 1.0, %v568
        %v570 = vmul.f32 %v567, %v569
        %v571 = vadd.f32 %v567, %v570
        %vm572 = vweird.f32 %v566
        %vm573 = vweird.f32 %v567
        %vm574 = vmor %vm572, %vm573
        %v575 = vsel %vm574, %v567, %v571
        %v576 = vand.u32 2147483647, %v566
        %vm577 = vcmp.eq.f32.partialorder %v576, 8.507059e+37
        %v578 = vand.u32 %v566, 2147483648
        %v579 = vor.u32 1.1754944e-38, %v578
        %v580 = vsel %vm577, %v579, %v575
        %v581 = vmul.f32 1.0, %v580
        %v582 = vtanh.pop %v562
        %v583 = vld [vmem:[%s372] sm:$0xff]
        %585 = vrot.lane.b32.xlu0 %v583, 32
        %v586 = vpop.permute.xlu0 %585
        %v588 = vmul.f32 %v581, %v586
        %590 = vrot.lane.b32.xlu0 %v582, 32
        %v591 = vpop.permute.xlu0 %590
        %v593 = vmul.f32 %v581, %v591
        %595 = vrot.lane.b32.xlu0 %v593, 32
        %v596 = vpop.permute.xlu0 %595
        %v598 = vadd.f32 %v588, %v596
        %v599 = vtanh.pop %v598
        %601 = vrot.lane.b32.xlu0 %v599, 32
        %v602 = vpop.permute.xlu0 %601
        %v604 = vmul.f32 %v581, %v602
        %606 = vrot.lane.b32.xlu0 %v604, 64
        %v607 = vpop.permute.xlu0 %606
        %609 = vst.msk [vmem:[%s414] sm:$0xff] %vm455, %v607
        %611 = vrot.lane.b32.xlu0 %v598, 96
        %v612 = vpop.permute.xlu0 %611
        %614 = vst.msk [vmem:[%s421] sm:$0xff] %vm455, %v612
        %s615 = sadd.s32 %s27, 1
        %p616 = scmp.lt.s32.totalorder %s615, 3
        // Predicated region
        $region73: #{_fused_forward.1} parent=43 // pred_check
          %p617 = pneg %p616
        $region74: #{_fused_forward.1} parent=43 // pred_check_branch
          %619 = sbr.rel (%p617) target = $region76
        $region75: #{_fused_forward.1} parent=43 // pred_region
          %v620 = vpack.c.bf16 %v604, %v604
          %622 = vrot.lane.b32.xlu0 %v620, 64
          %v623 = vpop.permute.xlu0 %622
          %vm625 = vcmask 257024
          %626 = vst.msk [vmem:[#allocation2] sm:$0xf] %vm625, %v623
        $region76: #{_fused_forward.1} parent=43 // pred_fallthru
          _
        %s627 = sand.u32 %s181, 1
        %s628 = scalar_lea.sflag [#allocation6], %s627
        %s629 = sand.u32 %s181, 1
        %s630 = smul.addr %s629, 8
        %s631 = scalar_lea.vmem [#allocation12], %s630
        %s632 = sand.u32 %s207, 1
        %s633 = scalar_lea.sflag [#allocation14], %s632
        %s634 = sand.u32 %s207, 1
        %s635 = smul.addr %s634, 8
        %s636 = scalar_lea.vmem [#allocation13], %s635
        // Predicated region
        $region77: #{_fused_forward.1} parent=43 // pred_check
          %p637 = pneg %p191
        $region78: #{_fused_forward.1} parent=43 // pred_check_branch
          %639 = sbr.rel (%p637) target = $region80
        $region79: #{_fused_forward.1} parent=43 // pred_region
          %641 = vsyncadd %s628, 0
          %s642 = smul.addr %s27, 8
          %s643 = scalar_lea.hbm %s6, %s642
          %s645 = sshll.u32 %s631, 4
          %s646 = int_to_ptr.vmem [resolvable:$true] %s645
          %s647 = sshll.u32 %s643, 4
          %s648 = int_to_ptr.hbm [resolvable:$true] %s647
          %650 = dma.vmem_to_hbm [thread:$0]  %s646, 128, %s648, %s628
        $region80: #{_fused_forward.1} parent=43 // pred_fallthru
          _
        // Predicated region
        $region81: #{_fused_forward.1} parent=43 // pred_check
          %p651 = pneg %p217
        $region82: #{_fused_forward.1} parent=43 // pred_check_branch
          %653 = sbr.rel (%p651) target = $region84
        $region83: #{_fused_forward.1} parent=43 // pred_region
          %655 = vsyncadd %s633, 0
          %s656 = smul.addr %s27, 8
          %s657 = scalar_lea.hbm %s7, %s656
          %s659 = sshll.u32 %s636, 4
          %s660 = int_to_ptr.vmem [resolvable:$true] %s659
          %s661 = sshll.u32 %s657, 4
          %s662 = int_to_ptr.hbm [resolvable:$true] %s661
          %664 = dma.vmem_to_hbm [thread:$0]  %s660, 128, %s662, %s633
        $region84: #{_fused_forward.1} parent=43 // pred_fallthru
          _
      $region44: #{_fused_forward.1} parent=5 // pred_fallthru
        _
      %p665 = scmp.le.s32.totalorder 2, %s22
      // Predicated region
      $region85: #{_fused_forward.1} parent=5 // pred_check
        %p666 = pneg %p665
      $region86: #{_fused_forward.1} parent=5 // pred_check_branch
        %668 = sbr.rel (%p666) target = $region88
      $region87: #{_fused_forward.1} parent=5 // pred_region
        %s669 = ssub.s32 %s22, 2
        // Predicated region
        $region89: #{_fused_forward.1} parent=87 // pred_check
          %p670 = pneg %p197
        $region90: #{_fused_forward.1} parent=87 // pred_check_branch
          %672 = sbr.rel (%p670) target = $region92
        $region91: #{_fused_forward.1} parent=87 // pred_region
          %s673 = sand.u32 %s182, 1
          %s674 = scalar_lea.sflag [#allocation6], %s673
          %s675 = sand.u32 %s182, 1
          %s676 = smul.addr %s675, 8
          %s677 = scalar_lea.vmem [#allocation12], %s676
          %679 = dma.done %s674, 128
        $region92: #{_fused_forward.1} parent=87 // pred_fallthru
          _
        // Predicated region
        $region93: #{_fused_forward.1} parent=87 // pred_check
          %p680 = pneg %p223
        $region94: #{_fused_forward.1} parent=87 // pred_check_branch
          %682 = sbr.rel (%p680) target = $region96
        $region95: #{_fused_forward.1} parent=87 // pred_region
          %s683 = sand.u32 %s208, 1
          %s684 = scalar_lea.sflag [#allocation14], %s683
          %s685 = sand.u32 %s208, 1
          %s686 = smul.addr %s685, 8
          %s687 = scalar_lea.vmem [#allocation13], %s686
          %689 = dma.done %s684, 128
        $region96: #{_fused_forward.1} parent=87 // pred_fallthru
          _
      $region88: #{_fused_forward.1} parent=5 // pred_fallthru
        _
    $region6: #{_fused_forward.1} parent=1 // loop_footer
      %s26 = sadd.s32 1, %s22
    $region7: #{_fused_forward.1} parent=1 // loop_footer_branch
      %21 = sbr.rel target = $region3
    $region8: #{_fused_forward.1} parent=1 // loop_exit
      _
    %690 = vsyncpa [#allocation5], 1
    %s691 = scalar_lea.sflag [#allocation5], 1
    %692 = vsyncpa %s691, 1
    %693 = vsyncpa [#allocation8], 1
    %694 = vsyncpa [#allocation6], 1
    %s695 = scalar_lea.sflag [#allocation6], 1
    %696 = vsyncpa %s695, 1
    %697 = vsyncpa [#allocation14], 1
    %s698 = scalar_lea.sflag [#allocation14], 1
    %699 = vsyncpa %s698, 1

</llo_original>
